<compile_context>
chip_gen: v7x
topology: tpu7x:2x2x1
jax: 0.10.0
libtpu: 0.0.40
codegen_flags: <defaults>
</compile_context>

<pallas_src>
import jax
import jax.numpy as jnp
from jax.experimental import pallas as pl
from jax.experimental.pallas import tpu as pltpu


# ----------------------------- Pallas kernel --------------------------------
def _inner_net_kernel(x_ref, w12_ref, b12_ref, w3_ref, b3_ref, o_ref):
    """Fused folded-conv1x1 -> ReLU -> conv1x1 on a lane-dense (c, tm) tile.

    x_ref  : (c_in, tm)   pixel tile, pixels on the lane axis
    w12_ref: (hid, c_in)  W12^T  (= (W1 @ W2)^T, conv1/conv2 folded)
    b12_ref: (hid, 1)     b12^T
    w3_ref : (c_out, hid) W3^T
    b3_ref : (c_out, 1)   b3^T
    o_ref  : (c_out, tm)  lane-dense output tile
    """
    x = x_ref[...]
    h = jnp.dot(w12_ref[...], x, preferred_element_type=jnp.float32) + b12_ref[...]
    h = jnp.maximum(h, 0.0)                                   # ReLU (UNetBaseBlock net)
    y = jnp.dot(w3_ref[...], h.astype(w3_ref.dtype),
                preferred_element_type=jnp.float32) + b3_ref[...]
    o_ref[...] = y.astype(o_ref.dtype)


def _pick_tile(m):
    """Largest tile in {1024,512,256} that still yields >=2 grid steps (v7x
    megacore), falling back to 128 for tiny inputs."""
    for tm in (1024, 512, 256):
        if pl.cdiv(m, tm) >= 2:
            return tm
    return 128


def run_inner_net(x_t, w12t, b12t, w3t, b3t, *, tm, use_bf16=False):
    """x_t: (c_in, Mp) pixels-on-lanes view, Mp a multiple of tm."""
    c_in, mp = x_t.shape
    hid = w12t.shape[0]
    c_out = w3t.shape[0]
    assert mp % tm == 0

    if use_bf16:
        # Optional bandwidth / native-MXU path for v6e/v7x. Biases stay f32,
        # accumulation stays f32 (preferred_element_type).
        x_t = x_t.astype(jnp.bfloat16)
        w12t = w12t.astype(jnp.bfloat16)
        w3t = w3t.astype(jnp.bfloat16)

    full = lambda i: (0, 0)
    return pl.pallas_call(
        _inner_net_kernel,
        out_shape=jax.ShapeDtypeStruct((c_out, mp), jnp.float32),
        grid_spec=pl.GridSpec(
            grid=(mp // tm,),
            in_specs=[
                pl.BlockSpec((c_in, tm), lambda i: (0, i)),   # pixel tile
                pl.BlockSpec((hid, c_in), full),              # W12^T (folded)
                pl.BlockSpec((hid, 1), full),                 # b12^T
                pl.BlockSpec((c_out, hid), full),             # W3^T
                pl.BlockSpec((c_out, 1), full),               # b3^T
            ],
            out_specs=pl.BlockSpec((c_out, tm), lambda i: (0, i)),
        ),
        compiler_params=pltpu.CompilerParams(
            dimension_semantics=("parallel",)),
    )(x_t, w12t, b12t, w3t, b3t)


# --------------------------- _InnerWrapper forward ---------------------------
class Config:
    scale_factor = 1          # pad H, W to multiples of 2**1
    padding_type = "zeros"    # -> 'constant' (zero) padding


def inner_wrapper_forward(x_nhwc, t, params, config=Config(), use_bf16=False):
    """Mirror of _InnerWrapper.forward. x_nhwc: (N, H, W, C)."""
    del t  # t is only used by FFCResNetBlock, absent in this synthetic net.

    n, dim_2, dim_1, c_in = x_nhwc.shape        # dim_2 = H, dim_1 = W (NCHW names)

    # _pad_to_divisible (zeros mode) applied directly in NHWC -- equivalent to
    # the reference's NCHW pad, without the two transposes on each side.
    modulo = 2 ** config.scale_factor
    pad_2 = (modulo - dim_2 % modulo) % modulo
    pad_1 = (modulo - dim_1 % modulo) % modulo
    xp = jnp.pad(x_nhwc, ((0, 0), (0, pad_2), (0, pad_1), (0, 0)))
    hp, wp = xp.shape[1], xp.shape[2]
    m = n * hp * wp

    # Fold conv1 & conv2 (no ReLU between them): algebraically exact.
    w1, b1, w2, b2, w3, b3 = params
    w12 = w1 @ w2                 # (c_in, hid)
    b12 = b1 @ w2 + b2            # (1, hid)
    c_out = w3.shape[1]

    # Lane-dense compute layout: pixels on the lane axis -> (c_in, M).
    # One small (M, c_in) -> (c_in, M) copy buys fully dense loads/stores in
    # the kernel (vs. 4/128-lane masked access in the channels-last layout).
    x_t = xp.reshape(m, c_in).T
    tm = _pick_tile(m)
    mp = pl.cdiv(m, tm) * tm
    if mp != m:
        x_t = jnp.pad(x_t, ((0, 0), (0, mp - m)))   # padded pixels cropped below

    y_t = run_inner_net(x_t, w12.T, b12.T, w3.T, b3.T, tm=tm, use_bf16=use_bf16)

    # crop padded pixels, back to NHWC, then crop the H/W zero-padding
    # (== x[..., :dim_2, :dim_1].permute(0, 2, 3, 1) in the reference).
    y = y_t[:, :m].T.reshape(n, hp, wp, c_out)
    return y[:, :dim_2, :dim_1, :]


def _reference(x_nhwc, params, config=Config()):
    """Pure-JAX reference of the original (NCHW, unfolded) forward."""
    w1, b1, w2, b2, w3, b3 = params
    x = jnp.transpose(x_nhwc, (0, 3, 1, 2))
    n, c, dim_2, dim_1 = x.shape
    modulo = 2 ** config.scale_factor
    x = jnp.pad(x, ((0, 0), (0, 0),
                    (0, (modulo - dim_2 % modulo) % modulo),
                    (0, (modulo - dim_1 % modulo) % modulo)))
    xf = jnp.transpose(x, (0, 2, 3, 1))
    h1 = xf @ w1 + b1[0]
    h2 = jnp.maximum(h1 @ w2 + b2[0], 0.0)
    y = h2 @ w3 + b3[0]
    y = jnp.transpose(y, (0, 3, 1, 2))[..., :dim_2, :dim_1]
    return jnp.transpose(y, (0, 2, 3, 1))


if __name__ == "__main__":
    key = jax.random.PRNGKey(0)
    k_x, k1, k2, k3, k4, k5, k6 = jax.random.split(key, 7)

    N, H, W, C_IN = 2, 15, 15, 4     # H, W not divisible by 2 -> padding exercised
    HID, C_OUT = 32, 4               # M = 2*16*16 = 512 -> tm=256, grid=2

    x = jax.random.normal(k_x, (N, H, W, C_IN), dtype=jnp.float32)
    t = jax.random.normal(k6, (N,), dtype=jnp.float32)  # unused (no FFCResNetBlock)

    # Synthetic 1x1-conv weights (Conv2d kernel (Cout,Cin,1,1) == matmul).
    w1 = jax.random.normal(k1, (C_IN, HID), dtype=jnp.float32) * 0.1
    b1 = jax.random.normal(k2, (1, HID), dtype=jnp.float32) * 0.1
    w2 = jax.random.normal(k3, (HID, HID), dtype=jnp.float32) * 0.1
    b2 = jax.random.normal(k4, (1, HID), dtype=jnp.float32) * 0.1
    w3 = jax.random.normal(k5, (HID, C_OUT), dtype=jnp.float32) * 0.1
    b3 = jax.random.normal(k6, (1, C_OUT), dtype=jnp.float32) * 0.1
    params = (w1, b1, w2, b2, w3, b3)

    out = inner_wrapper_forward(x, t, params)
    out = jax.block_until_ready(out)
    assert out.shape == (N, H, W, C_OUT), out.shape

    ref = _reference(x, params)
    assert jnp.allclose(out, ref, atol=1e-5, rtol=1e-4), "mismatch vs reference"

    print("KERNEL_OK")
</pallas_src>

<mosaic_0001>
module attributes {stable_mosaic.version = 11 : i64} {
  func.func @_inner_net_kernel(%arg0: i32, %arg1: memref<4x256xf32, #tpu.memory_space<vmem>>, %arg2: memref<32x4xf32, #tpu.memory_space<vmem>>, %arg3: memref<32x1xf32, #tpu.memory_space<vmem>>, %arg4: memref<4x32xf32, #tpu.memory_space<vmem>>, %arg5: memref<4x1xf32, #tpu.memory_space<vmem>>, %arg6: memref<4x256xf32, #tpu.memory_space<vmem>>) attributes {dimension_semantics = [#tpu.dimension_semantics<parallel>], iteration_bounds = array<i64: 2>, scalar_prefetch = 0 : i64, scratch_operands = 0 : i64, tpu.core_type = #tpu.core_type<tc>, window_params = [{transform_indices = @transform_0, window_bounds = array<i64: 4, 256>}, {pipeline_mode = #tpu.pipeline_mode<synchronous>, transform_indices = @transform_1, window_bounds = array<i64: 32, 4>}, {pipeline_mode = #tpu.pipeline_mode<synchronous>, transform_indices = @transform_2, window_bounds = array<i64: 32, 1>}, {pipeline_mode = #tpu.pipeline_mode<synchronous>, transform_indices = @transform_3, window_bounds = array<i64: 4, 32>}, {pipeline_mode = #tpu.pipeline_mode<synchronous>, transform_indices = @transform_4, window_bounds = array<i64: 4, 1>}, {transform_indices = @transform_5, window_bounds = array<i64: 4, 256>}]} {
    %c0 = arith.constant 0 : index
    %c0_0 = arith.constant 0 : index
    %0 = vector.load %arg1[%c0, %c0_0] : memref<4x256xf32, #tpu.memory_space<vmem>>, vector<4x256xf32>
    %c0_1 = arith.constant 0 : index
    %c0_2 = arith.constant 0 : index
    %1 = vector.load %arg2[%c0_1, %c0_2] : memref<32x4xf32, #tpu.memory_space<vmem>>, vector<32x4xf32>
    %cst = arith.constant dense<0.000000e+00> : vector<32x256xf32>
    %2 = tpu.matmul %1, %0, %cst {dimension_numbers = #tpu.dot_dimension_numbers<[1], [0], [0], [1], [0, 0, 1, 1], [], []>} : vector<32x4xf32>, vector<4x256xf32>, vector<32x256xf32> -> vector<32x256xf32>
    %c0_3 = arith.constant 0 : index
    %c0_4 = arith.constant 0 : index
    %3 = vector.load %arg3[%c0_3, %c0_4] : memref<32x1xf32, #tpu.memory_space<vmem>>, vector<32x1xf32>
    %4 = vector.broadcast %3 : vector<32x1xf32> to vector<32x256xf32>
    %5 = arith.addf %2, %4 : vector<32x256xf32>
    %cst_5 = arith.constant 0.000000e+00 : f32
    %6 = vector.broadcast %cst_5 : f32 to vector<32x256xf32>
    %7 = arith.maximumf %5, %6 : vector<32x256xf32>
    %c0_6 = arith.constant 0 : index
    %c0_7 = arith.constant 0 : index
    %8 = vector.load %arg4[%c0_6, %c0_7] : memref<4x32xf32, #tpu.memory_space<vmem>>, vector<4x32xf32>
    %cst_8 = arith.constant dense<0.000000e+00> : vector<4x256xf32>
    %9 = tpu.matmul %8, %7, %cst_8 {dimension_numbers = #tpu.dot_dimension_numbers<[1], [0], [0], [1], [0, 0, 1, 1], [], []>} : vector<4x32xf32>, vector<32x256xf32>, vector<4x256xf32> -> vector<4x256xf32>
    %c0_9 = arith.constant 0 : index
    %c0_10 = arith.constant 0 : index
    %10 = vector.load %arg5[%c0_9, %c0_10] : memref<4x1xf32, #tpu.memory_space<vmem>>, vector<4x1xf32>
    %11 = vector.broadcast %10 : vector<4x1xf32> to vector<4x256xf32>
    %12 = arith.addf %9, %11 : vector<4x256xf32>
    %c0_11 = arith.constant 0 : index
    %c0_12 = arith.constant 0 : index
    %13 = vector.load %arg6[%c0_11, %c0_12] : memref<4x256xf32, #tpu.memory_space<vmem>>, vector<4x256xf32>
    tpu.vector_store %arg6[%c0_11, %c0_12], %12 {strides = array<i32>} : memref<4x256xf32, #tpu.memory_space<vmem>>, vector<4x256xf32>,
    return
  }
  func.func @transform_0(%arg0: i32) -> (i32, i32) {
    %c0_i32 = arith.constant 0 : i32
    %c0_i32_0 = arith.constant 0 : i32
    return %c0_i32, %arg0 : i32, i32
  }
  func.func @transform_1(%arg0: i32) -> (i32, i32) {
    %c0_i32 = arith.constant 0 : i32
    %c0_i32_0 = arith.constant 0 : i32
    %c0_i32_1 = arith.constant 0 : i32
    return %c0_i32, %c0_i32_0 : i32, i32
  }
  func.func @transform_2(%arg0: i32) -> (i32, i32) {
    %c0_i32 = arith.constant 0 : i32
    %c0_i32_0 = arith.constant 0 : i32
    %c0_i32_1 = arith.constant 0 : i32
    return %c0_i32, %c0_i32_0 : i32, i32
  }
  func.func @transform_3(%arg0: i32) -> (i32, i32) {
    %c0_i32 = arith.constant 0 : i32
    %c0_i32_0 = arith.constant 0 : i32
    %c0_i32_1 = arith.constant 0 : i32
    return %c0_i32, %c0_i32_0 : i32, i32
  }
  func.func @transform_4(%arg0: i32) -> (i32, i32) {
    %c0_i32 = arith.constant 0 : i32
    %c0_i32_0 = arith.constant 0 : i32
    %c0_i32_1 = arith.constant 0 : i32
    return %c0_i32, %c0_i32_0 : i32, i32
  }
  func.func @transform_5(%arg0: i32) -> (i32, i32) {
    %c0_i32 = arith.constant 0 : i32
    %c0_i32_0 = arith.constant 0 : i32
    return %c0_i32, %arg0 : i32, i32
  }
}

</mosaic_0001>

<llo_original>
// kernel: tpu_custom_call.1
$region0: #{tpu_custom_call.1}
  #allocation0 [shape = 'u32[]', space=smem, size = 0x4, offset = 0x4, fixed_abs, tag = 'smem constant byte address 0x4 - core index']
  #allocation1 [shape = 'u32[144,128]{1,0:T(1,128)}', space=vmem, size = 0x12000, scoped, tag = 'internal scratch']
  %s0 = inlined_call_operand.vmem [shape: f32[4,512], index: 0, kind: input, shape index: {}]
  %s1 = inlined_call_operand.vmem [shape: f32[32,4], index: 1, kind: input, shape index: {}]
  %s2 = inlined_call_operand.vmem [shape: f32[32,1], index: 2, kind: input, shape index: {}]
  %s3 = inlined_call_operand.vmem [shape: f32[4,32], index: 3, kind: input, shape index: {}]
  %s4 = inlined_call_operand.vmem [shape: f32[4,1], index: 4, kind: input, shape index: {}]
  %s5 = inlined_call_operand.hbm [shape: f32[4,512], index: 5, kind: output, shape index: {}]
  %s6 = sld [smem:[#allocation0]]
  $region53: #{tpu_custom_call.1} parent=0
    _
  %s8 = ssub.s32 1, %s6
  %s9 = scalar_select 0, %s8, %s6
  $region1: #{tpu_custom_call.1} parent=0
    #allocation2 [shape = 'u8[8192]{0}', space=vmem, size = 0x2000, scoped, tag = 'output window, operand 0']
    #allocation3 [shape = 's32[2]{0}', space=sflag, size = 0x8, scoped, tag = 'scoped memory for tpu_custom_call.1']
    %10 = vsyncpa [#allocation3], 0
    %s11 = scalar_lea.sflag [#allocation3], 1
    %12 = vsyncpa %s11, 0
    loop: start=0, step=1, limit=4
    $region2: #{tpu_custom_call.1} parent=1 // loop_pre_header
      _
    $region3: #{tpu_custom_call.1} parent=1 // loop_header
      %s14 = sphi 0, %s18
      %p15 = scmp.ge.s32.totalorder %s14, 4
      %s24 = sphi 0, %s26
      %s27 = sphi 0, %s24
      %s28 = sphi 0, %s27
      %s44 = sphi 0, %s28
      %s48 = sphi 0, %s48
      %s50 = sphi 0, %s48
      %s51 = sphi 0, %s50
      %s65 = sphi 0, %s51
      %s69 = sphi 0, %s69
      %s71 = sphi 0, %s69
      %s72 = sphi 0, %s71
      %s86 = sphi 0, %s72
      %s90 = sphi 0, %s90
      %s92 = sphi 0, %s90
      %s93 = sphi 0, %s92
      %s107 = sphi 0, %s93
      %s111 = sphi 0, %s111
      %s113 = sphi 0, %s111
      %s114 = sphi 0, %s113
      %s128 = sphi 0, %s114
      %s134 = sphi 0, %s136
      %s137 = sphi 0, %s134
      %s138 = sphi 0, %s137
      %s154 = sphi 0, %s138
    $region4: #{tpu_custom_call.1} parent=1 // loop_header_branch
      %17 = sbr.rel (%p15) target = $region8
    $region5: #{tpu_custom_call.1} parent=1 // loop_body
      %s19 = ssub.s32 %s14, 1
      %s20 = ssub.s32 %s14, 2
      %s21 = sadd.s32 %s14, 1
      %s22 = ssub.s32 %s14, %s21
      %p23 = scmp.eq.s32.totalorder %s22, 0
      %s25 = sadd.s32 %s24, 1
      %s26 = scalar_select %p23, %s24, %s25
      %p29 = pneg %p23
      %p30 = scmp.eq.s32.totalorder %s14, 1
      %p31 = por %p29, %p30
      %p32 = scmp.ne.s32.totalorder %s24, %s27
      %p33 = scmp.eq.s32.totalorder %s14, 0
      %p34 = por %p32, %p33
      %p35 = scmp.ne.s32.totalorder %s24, %s27
      %p36 = scmp.eq.s32.totalorder %s19, 1
      %p37 = por %p35, %p36
      %p38 = scmp.ne.s32.totalorder %s27, %s28
      %p39 = scmp.eq.s32.totalorder %s19, 0
      %p40 = por %p38, %p39
      %p41 = scmp.ne.s32.totalorder %s27, %s28
      %p42 = scmp.eq.s32.totalorder %s20, 1
      %p43 = por %p41, %p42
      %p45 = scmp.ne.s32.totalorder %s28, %s44
      %p46 = scmp.eq.s32.totalorder %s20, 0
      %p47 = por %p45, %p46
      %s49 = sadd.s32 %s48, 1
      %p52 = scmp.eq.s32.totalorder %s14, 1
      %p53 = scmp.ne.s32.totalorder %s48, %s50
      %p54 = scmp.eq.s32.totalorder %s14, 0
      %p55 = por %p53, %p54
      %p56 = scmp.ne.s32.totalorder %s48, %s50
      %p57 = scmp.eq.s32.totalorder %s19, 1
      %p58 = por %p56, %p57
      %p59 = scmp.ne.s32.totalorder %s50, %s51
      %p60 = scmp.eq.s32.totalorder %s19, 0
      %p61 = por %p59, %p60
      %p62 = scmp.ne.s32.totalorder %s50, %s51
      %p63 = scmp.eq.s32.totalorder %s20, 1
      %p64 = por %p62, %p63
      %p66 = scmp.ne.s32.totalorder %s51, %s65
      %p67 = scmp.eq.s32.totalorder %s20, 0
      %p68 = por %p66, %p67
      %s70 = sadd.s32 %s69, 1
      %p73 = scmp.eq.s32.totalorder %s14, 1
      %p74 = scmp.ne.s32.totalorder %s69, %s71
      %p75 = scmp.eq.s32.totalorder %s14, 0
      %p76 = por %p74, %p75
      %p77 = scmp.ne.s32.totalorder %s69, %s71
      %p78 = scmp.eq.s32.totalorder %s19, 1
      %p79 = por %p77, %p78
      %p80 = scmp.ne.s32.totalorder %s71, %s72
      %p81 = scmp.eq.s32.totalorder %s19, 0
      %p82 = por %p80, %p81
      %p83 = scmp.ne.s32.totalorder %s71, %s72
      %p84 = scmp.eq.s32.totalorder %s20, 1
      %p85 = por %p83, %p84
      %p87 = scmp.ne.s32.totalorder %s72, %s86
      %p88 = scmp.eq.s32.totalorder %s20, 0
      %p89 = por %p87, %p88
      %s91 = sadd.s32 %s90, 1
      %p94 = scmp.eq.s32.totalorder %s14, 1
      %p95 = scmp.ne.s32.totalorder %s90, %s92
      %p96 = scmp.eq.s32.totalorder %s14, 0
      %p97 = por %p95, %p96
      %p98 = scmp.ne.s32.totalorder %s90, %s92
      %p99 = scmp.eq.s32.totalorder %s19, 1
      %p100 = por %p98, %p99
      %p101 = scmp.ne.s32.totalorder %s92, %s93
      %p102 = scmp.eq.s32.totalorder %s19, 0
      %p103 = por %p101, %p102
      %p104 = scmp.ne.s32.totalorder %s92, %s93
      %p105 = scmp.eq.s32.totalorder %s20, 1
      %p106 = por %p104, %p105
      %p108 = scmp.ne.s32.totalorder %s93, %s107
      %p109 = scmp.eq.s32.totalorder %s20, 0
      %p110 = por %p108, %p109
      %s112 = sadd.s32 %s111, 1
      %p115 = scmp.eq.s32.totalorder %s14, 1
      %p116 = scmp.ne.s32.totalorder %s111, %s113
      %p117 = scmp.eq.s32.totalorder %s14, 0
      %p118 = por %p116, %p117
      %p119 = scmp.ne.s32.totalorder %s111, %s113
      %p120 = scmp.eq.s32.totalorder %s19, 1
      %p121 = por %p119, %p120
      %p122 = scmp.ne.s32.totalorder %s113, %s114
      %p123 = scmp.eq.s32.totalorder %s19, 0
      %p124 = por %p122, %p123
      %p125 = scmp.ne.s32.totalorder %s113, %s114
      %p126 = scmp.eq.s32.totalorder %s20, 1
      %p127 = por %p125, %p126
      %p129 = scmp.ne.s32.totalorder %s114, %s128
      %p130 = scmp.eq.s32.totalorder %s20, 0
      %p131 = por %p129, %p130
      %s132 = ssub.s32 %s14, %s21
      %p133 = scmp.eq.s32.totalorder %s132, 0
      %s135 = sadd.s32 %s134, 1
      %s136 = scalar_select %p133, %s134, %s135
      %p139 = pneg %p133
      %p140 = scmp.eq.s32.totalorder %s14, 1
      %p141 = por %p139, %p140
      %p142 = scmp.ne.s32.totalorder %s134, %s137
      %p143 = scmp.eq.s32.totalorder %s14, 0
      %p144 = por %p142, %p143
      %p145 = scmp.ne.s32.totalorder %s134, %s137
      %p146 = scmp.eq.s32.totalorder %s19, 1
      %p147 = por %p145, %p146
      %p148 = scmp.ne.s32.totalorder %s137, %s138
      %p149 = scmp.eq.s32.totalorder %s19, 0
      %p150 = por %p148, %p149
      %p151 = scmp.ne.s32.totalorder %s137, %s138
      %p152 = scmp.eq.s32.totalorder %s20, 1
      %p153 = por %p151, %p152
      %p155 = scmp.ne.s32.totalorder %s138, %s154
      %p156 = scmp.eq.s32.totalorder %s20, 0
      %p157 = por %p155, %p156
      %p158 = scmp.le.s32.totalorder 1, %s14
      %p159 = scmp.lt.s32.totalorder %s14, 3
      %p160 = pnand %p158, %p159
      %p161 = pneg %p160
      // Predicated region
      $region9: #{tpu_custom_call.1} parent=5 // pred_check
        _
      $region10: #{tpu_custom_call.1} parent=5 // pred_check_branch
        %163 = sbr.rel (%p160) target = $region12
      $region11: #{tpu_custom_call.1} parent=5 // pred_region
        %s164 = ssub.s32 %s14, 1
        // Predicated region
        $region13: #{tpu_custom_call.1} parent=11 // pred_check
          %p165 = pneg %p61
        $region14: #{tpu_custom_call.1} parent=11 // pred_check_branch
          %167 = sbr.rel (%p165) target = $region16
        $region15: #{tpu_custom_call.1} parent=11 // pred_region
          _
        $region16: #{tpu_custom_call.1} parent=11 // pred_fallthru
          _
        // Predicated region
        $region17: #{tpu_custom_call.1} parent=11 // pred_check
          %p168 = pneg %p82
        $region18: #{tpu_custom_call.1} parent=11 // pred_check_branch
          %170 = sbr.rel (%p168) target = $region20
        $region19: #{tpu_custom_call.1} parent=11 // pred_region
          _
        $region20: #{tpu_custom_call.1} parent=11 // pred_fallthru
          _
        // Predicated region
        $region21: #{tpu_custom_call.1} parent=11 // pred_check
          %p171 = pneg %p103
        $region22: #{tpu_custom_call.1} parent=11 // pred_check_branch
          %173 = sbr.rel (%p171) target = $region24
        $region23: #{tpu_custom_call.1} parent=11 // pred_region
          _
        $region24: #{tpu_custom_call.1} parent=11 // pred_fallthru
          _
        // Predicated region
        $region25: #{tpu_custom_call.1} parent=11 // pred_check
          %p174 = pneg %p124
        $region26: #{tpu_custom_call.1} parent=11 // pred_check_branch
          %176 = sbr.rel (%p174) target = $region28
        $region27: #{tpu_custom_call.1} parent=11 // pred_region
          _
        $region28: #{tpu_custom_call.1} parent=11 // pred_fallthru
          _
      $region12: #{tpu_custom_call.1} parent=5 // pred_fallthru
        _
      %p177 = scmp.lt.s32.totalorder %s14, 2
      // Predicated region
      $region29: #{tpu_custom_call.1} parent=5 // pred_check
        %p178 = pneg %p177
      $region30: #{tpu_custom_call.1} parent=5 // pred_check_branch
        %180 = sbr.rel (%p178) target = $region32
      $region31: #{tpu_custom_call.1} parent=5 // pred_region
        // Predicated region
        $region33: #{tpu_custom_call.1} parent=31 // pred_check
          %p181 = pneg %p34
        $region34: #{tpu_custom_call.1} parent=31 // pred_check_branch
          %183 = sbr.rel (%p181) target = $region36
        $region35: #{tpu_custom_call.1} parent=31 // pred_region
          %s184 = smul.u32 2, %s14
          %p185 = scmp.lt.s32.totalorder %s184, 3
          %s186 = scalar_select %p185, %s184, 3
          %s187 = smul.addr %s186, 4
          %s188 = scalar_lea.vmem %s0, %s187
          %s189 = smul.u32 2, %s14
        $region36: #{tpu_custom_call.1} parent=31 // pred_fallthru
          _
      $region32: #{tpu_custom_call.1} parent=5 // pred_fallthru
        _
      %p190 = scmp.le.s32.totalorder 1, %s14
      %p191 = scmp.lt.s32.totalorder %s14, 3
      %p192 = pnand %p190, %p191
      %p193 = pneg %p192
      // Predicated region
      $region37: #{tpu_custom_call.1} parent=5 // pred_check
        _
      $region38: #{tpu_custom_call.1} parent=5 // pred_check_branch
        %195 = sbr.rel (%p192) target = $region40
      $region39: #{tpu_custom_call.1} parent=5 // pred_region
        %s196 = ssub.s32 %s14, 1
        %s197 = smul.u32 2, %s19
        %p198 = scmp.lt.s32.totalorder %s197, 3
        %s199 = scalar_select %p198, %s197, 3
        %s200 = smul.addr %s199, 4
        %s201 = scalar_lea.vmem %s0, %s200
        %p202 = pneg %p40
        %p203 = pneg %p37
        %p204 = pneg %p61
        %p205 = pneg %p58
        %p206 = pneg %p82
        %p207 = pneg %p79
        %p208 = pneg %p103
        %p209 = pneg %p100
        %p210 = pneg %p124
        %p211 = pneg %p121
        %p212 = pneg %p150
        %p213 = pneg %p147
        %s214 = sand.u32 %s137, 1
        %s215 = scalar_lea.sflag [#allocation3], %s214
        %s216 = sand.u32 %s137, 1
        %s217 = smul.addr %s216, 8
        %s218 = scalar_lea.vmem [#allocation2], %s217
        %s219 = smul.u32 2, %s19
        %p220 = scmp.lt.s32.totalorder %s219, 3
        %s221 = scalar_select %p220, %s219, 3
        %s222 = smul.addr %s221, 4
        %s223 = scalar_lea.vmem %s0, %s222
        %s224 = smul.u32 2, %s19
        %s225 = smul.u32 2, %s19
        %v226 = vld [vmem:[%s223] sm:$0xff]
        %v227 = vld [vmem:[%s1] sm:$0xff]
        %v228 = vld [vmem:[%s1 + $0x8] sm:$0xff]
        %v229 = vld [vmem:[%s1 + $0x10] sm:$0xff]
        %v230 = vld [vmem:[%s1 + $0x18] sm:$0xff]
        %v231 = vld [vmem:[%s2] sm:$0xff]
        %v232 = vld [vmem:[%s2 + $0x8] sm:$0xff]
        %v233 = vld [vmem:[%s2 + $0x10] sm:$0xff]
        %v234 = vld [vmem:[%s2 + $0x18] sm:$0xff]
        %236 = vset.pattern.permute.xlu0 0
        %237 = vperm.xlu0 %236, %v231
        %v238 = vpop.permute.xlu0 %237
        %241 = vset.pattern.permute.xlu0 0
        %242 = vperm.xlu0 %241, %v232
        %v243 = vpop.permute.xlu0 %242
        %246 = vset.pattern.permute.xlu0 0
        %247 = vperm.xlu0 %246, %v233
        %v248 = vpop.permute.xlu0 %247
        %251 = vset.pattern.permute.xlu0 0
        %252 = vperm.xlu0 %251, %v234
        %v253 = vpop.permute.xlu0 %252
        %v256 = vcombine.high %v226, %v226
        %vm257 = vcmask 31744
        %v259 = vsel %vm257, %v227, 0
        %v262 = vsel %vm257, %v228, 0
        %v265 = vsel %vm257, %v229, 0
        %v268 = vsel %vm257, %v230, 0
        %vm270 = vcmask 1043456
        %v271 = vsel %vm270, %v226, 0
        %v273 = vsel %vm270, %v256, 0
        %275 = vmatprep.subr.mxu0 %v273
        %276 = vmatpush1.msra.mxu0 %v271
        %277 = vmatprep.subr.mxu0 0.0
        %278 = vmatpush1.msra.mxu0 0.0
        %279 = vmatprep.subr.mxu0 0.0
        %280 = vmatpush1.msra.mxu0 0.0
        %281 = vmatprep.subr.mxu0 0.0
        %282 = vmatpush1.msra.mxu0 0.0
        %283 = vmatprep.subr.mxu0 0.0
        %284 = vmatpush1.msra.mxu0 0.0
        %285 = vmatprep.subr.mxu0 0.0
        %286 = vmatpush1.msra.mxu0 0.0
        %287 = vmatprep.subr.mxu0 0.0
        %288 = vmatpush1.msra.mxu0 0.0
        %289 = vmatprep.subr.mxu0 0.0
        %290 = vmatpush1.msra.mxu0 0.0
        %291 = vmatprep.subr.mxu0 0.0
        %292 = vmatpush1.msra.mxu0 0.0
        %293 = vmatprep.subr.mxu0 0.0
        %294 = vmatpush1.msra.mxu0 0.0
        %295 = vmatprep.subr.mxu0 0.0
        %296 = vmatpush1.msra.mxu0 0.0
        %297 = vmatprep.subr.mxu0 0.0
        %298 = vmatpush1.msra.mxu0 0.0
        %299 = vmatprep.subr.mxu0 0.0
        %300 = vmatpush1.msra.mxu0 0.0
        %301 = vmatprep.subr.mxu0 0.0
        %302 = vmatpush1.msra.mxu0 0.0
        %303 = vmatprep.subr.mxu0 0.0
        %304 = vmatpush1.msra.mxu0 0.0
        %305 = vmatprep.subr.mxu0 0.0
        %306 = vmatpush1.msra.mxu0 0.0
        %307 = vmatprep.subr.mxu0 0.0
        %308 = vmatpush1.msra.mxu0 0.0
        %309 = vmatprep.subr.mxu0 0.0
        %310 = vmatpush1.msra.mxu0 0.0
        %311 = vmatprep.subr.mxu0 0.0
        %312 = vmatpush1.msra.mxu0 0.0
        %313 = vmatprep.subr.mxu0 0.0
        %314 = vmatpush1.msra.mxu0 0.0
        %315 = vmatprep.subr.mxu0 0.0
        %316 = vmatpush1.msra.mxu0 0.0
        %317 = vmatprep.subr.mxu0 0.0
        %318 = vmatpush1.msra.mxu0 0.0
        %319 = vmatprep.subr.mxu0 0.0
        %320 = vmatpush1.msra.mxu0 0.0
        %321 = vmatprep.subr.mxu0 0.0
        %322 = vmatpush1.msra.mxu0 0.0
        %323 = vmatprep.subr.mxu0 0.0
        %324 = vmatpush1.msra.mxu0 0.0
        %325 = vmatprep.subr.mxu0 0.0
        %326 = vmatpush1.msra.mxu0 0.0
        %327 = vmatprep.subr.mxu0 0.0
        %328 = vmatpush1.msra.mxu0 0.0
        %329 = vmatprep.subr.mxu0 0.0
        %330 = vmatpush1.msra.mxu0 0.0
        %331 = vmatprep.subr.mxu0 0.0
        %332 = vmatpush1.msra.mxu0 0.0
        %333 = vmatprep.subr.mxu0 0.0
        %334 = vmatpush1.msra.mxu0 0.0
        %335 = vmatprep.subr.mxu0 0.0
        %336 = vmatpush1.msra.mxu0 0.0
        %337 = vmatprep.subr.mxu0 0.0
        %338 = vmatpush1.msra.mxu0 0.0
        %339 = vmatprep.mubr.f32.mxu0 0.0
        %340 = vmatmul.mubr.f32.gmra.mrb[0].mxu0 %v259
        %v341 = vpop.f32.mrb[0].mxu0
        %v342 = vadd.f32 %v238, %v341
        %v343 = vpop.f32.mrb[0].mxu0
        %v344 = vadd.f32 %v238, %v343
        %345 = vmatprep.mubr.f32.mxu0 0.0
        %346 = vmatmul.mubr.f32.gmra.mrb[0].mxu0 %v262
        %v347 = vpop.f32.mrb[0].mxu0
        %v348 = vadd.f32 %v243, %v347
        %v349 = vpop.f32.mrb[0].mxu0
        %v350 = vadd.f32 %v243, %v349
        %351 = vmatprep.mubr.f32.mxu0 0.0
        %352 = vmatmul.mubr.f32.gmra.mrb[0].mxu0 %v265
        %v353 = vpop.f32.mrb[0].mxu0
        %v354 = vadd.f32 %v248, %v353
        %v355 = vpop.f32.mrb[0].mxu0
        %v356 = vadd.f32 %v248, %v355
        %357 = vmatprep.mubr.f32.mxu0 0.0
        %358 = vmatmul.mubr.f32.gmra.mrb[0].mxu0 %v268
        %v359 = vpop.f32.mrb[0].mxu0
        %v360 = vadd.f32 %v253, %v359
        %v361 = vpop.f32.mrb[0].mxu0
        %v362 = vadd.f32 %v253, %v361
        %363 = vdwg.mxu0
        %v364 = vmax.f32 %v342, 0.0
        %v365 = vmax.f32 %v344, 0.0
        %v366 = vmax.f32 %v348, 0.0
        %v367 = vmax.f32 %v350, 0.0
        %v368 = vmax.f32 %v354, 0.0
        %v369 = vmax.f32 %v356, 0.0
        %v370 = vmax.f32 %v360, 0.0
        %v371 = vmax.f32 %v362, 0.0
        %v372 = vld [vmem:[%s3] sm:$0xf]
        %v373 = vld [vmem:[%s4] sm:$0xf]
        %375 = vset.pattern.permute.xlu0 0
        %376 = vperm.xlu0 %375, %v373
        %v377 = vpop.permute.xlu0 %376
        %vm379 = vcmask 261120
        %v381 = vsel %vm379, %v372, 0
        %383 = vmatprep.subr.mxu0 %v365
        %384 = vmatpush1.msra.mxu0 %v364
        %385 = vmatprep.subr.mxu0 %v367
        %386 = vmatpush1.msra.mxu0 %v366
        %387 = vmatprep.subr.mxu0 %v369
        %388 = vmatpush1.msra.mxu0 %v368
        %389 = vmatprep.subr.mxu0 %v371
        %390 = vmatpush1.msra.mxu0 %v370
        %391 = vmatprep.subr.mxu0 0.0
        %392 = vmatpush1.msra.mxu0 0.0
        %393 = vmatprep.subr.mxu0 0.0
        %394 = vmatpush1.msra.mxu0 0.0
        %395 = vmatprep.subr.mxu0 0.0
        %396 = vmatpush1.msra.mxu0 0.0
        %397 = vmatprep.subr.mxu0 0.0
        %398 = vmatpush1.msra.mxu0 0.0
        %399 = vmatprep.subr.mxu0 0.0
        %400 = vmatpush1.msra.mxu0 0.0
        %401 = vmatprep.subr.mxu0 0.0
        %402 = vmatpush1.msra.mxu0 0.0
        %403 = vmatprep.subr.mxu0 0.0
        %404 = vmatpush1.msra.mxu0 0.0
        %405 = vmatprep.subr.mxu0 0.0
        %406 = vmatpush1.msra.mxu0 0.0
        %407 = vmatprep.subr.mxu0 0.0
        %408 = vmatpush1.msra.mxu0 0.0
        %409 = vmatprep.subr.mxu0 0.0
        %410 = vmatpush1.msra.mxu0 0.0
        %411 = vmatprep.subr.mxu0 0.0
        %412 = vmatpush1.msra.mxu0 0.0
        %413 = vmatprep.subr.mxu0 0.0
        %414 = vmatpush1.msra.mxu0 0.0
        %415 = vmatprep.subr.mxu0 0.0
        %416 = vmatpush1.msra.mxu0 0.0
        %417 = vmatprep.subr.mxu0 0.0
        %418 = vmatpush1.msra.mxu0 0.0
        %419 = vmatprep.subr.mxu0 0.0
        %420 = vmatpush1.msra.mxu0 0.0
        %421 = vmatprep.subr.mxu0 0.0
        %422 = vmatpush1.msra.mxu0 0.0
        %423 = vmatprep.subr.mxu0 0.0
        %424 = vmatpush1.msra.mxu0 0.0
        %425 = vmatprep.subr.mxu0 0.0
        %426 = vmatpush1.msra.mxu0 0.0
        %427 = vmatprep.subr.mxu0 0.0
        %428 = vmatpush1.msra.mxu0 0.0
        %429 = vmatprep.subr.mxu0 0.0
        %430 = vmatpush1.msra.mxu0 0.0
        %431 = vmatprep.subr.mxu0 0.0
        %432 = vmatpush1.msra.mxu0 0.0
        %433 = vmatprep.subr.mxu0 0.0
        %434 = vmatpush1.msra.mxu0 0.0
        %435 = vmatprep.subr.mxu0 0.0
        %436 = vmatpush1.msra.mxu0 0.0
        %437 = vmatprep.subr.mxu0 0.0
        %438 = vmatpush1.msra.mxu0 0.0
        %439 = vmatprep.subr.mxu0 0.0
        %440 = vmatpush1.msra.mxu0 0.0
        %441 = vmatprep.subr.mxu0 0.0
        %442 = vmatpush1.msra.mxu0 0.0
        %443 = vmatprep.subr.mxu0 0.0
        %444 = vmatpush1.msra.mxu0 0.0
        %445 = vmatprep.subr.mxu0 0.0
        %446 = vmatpush1.msra.mxu0 0.0
        %447 = vmatprep.mubr.f32.mxu0 0.0
        %448 = vmatmul.mubr.f32.gmra.mrb[0].mxu0 %v381
        %v449 = vpop.f32.mrb[0].mxu0
        %v450 = vadd.f32 %v377, %v449
        %v451 = vpop.f32.mrb[0].mxu0
        %v452 = vadd.f32 %v377, %v451
        %453 = vdwg.mxu0
        %v456 = vcombine.low %v450, %v452
        %458 = vst [vmem:[%s218] sm:$0xff] %v456
        %s459 = sand.u32 %s137, 1
        %s460 = scalar_lea.sflag [#allocation3], %s459
        %s461 = sand.u32 %s137, 1
        %s462 = smul.addr %s461, 8
        %s463 = scalar_lea.vmem [#allocation2], %s462
        // Predicated region
        $region41: #{tpu_custom_call.1} parent=39 // pred_check
          %p464 = pneg %p147
        $region42: #{tpu_custom_call.1} parent=39 // pred_check_branch
          %466 = sbr.rel (%p464) target = $region44
        $region43: #{tpu_custom_call.1} parent=39 // pred_region
          %s467 = smul.u32 2, %s19
          %s469 = ssub.s32 128, 128
          %470 = vsyncadd %s460, %s469
          %s471 = smul.addr %s467, 64
          %s472 = scalar_lea.hbm %s5, %s471
          %s474 = sshll.u32 %s463, 4
          %s475 = int_to_ptr.vmem [resolvable:$true] %s474
          %477 = dma.vmem_to_hbm [thread:$0]  %s475, 128, %s472, %s460
        $region44: #{tpu_custom_call.1} parent=39 // pred_fallthru
          _
      $region40: #{tpu_custom_call.1} parent=5 // pred_fallthru
        _
      %p478 = scmp.le.s32.totalorder 2, %s14
      // Predicated region
      $region45: #{tpu_custom_call.1} parent=5 // pred_check
        %p479 = pneg %p478
      $region46: #{tpu_custom_call.1} parent=5 // pred_check_branch
        %481 = sbr.rel (%p479) target = $region48
      $region47: #{tpu_custom_call.1} parent=5 // pred_region
        %s482 = ssub.s32 %s14, 2
        // Predicated region
        $region49: #{tpu_custom_call.1} parent=47 // pred_check
          %p483 = pneg %p153
        $region50: #{tpu_custom_call.1} parent=47 // pred_check_branch
          %485 = sbr.rel (%p483) target = $region52
        $region51: #{tpu_custom_call.1} parent=47 // pred_region
          %s486 = sand.u32 %s138, 1
          %s487 = scalar_lea.sflag [#allocation3], %s486
          %s488 = sand.u32 %s138, 1
          %s489 = smul.addr %s488, 8
          %s490 = scalar_lea.vmem [#allocation2], %s489
          %491 = dma.done %s487, 128
        $region52: #{tpu_custom_call.1} parent=47 // pred_fallthru
          _
      $region48: #{tpu_custom_call.1} parent=5 // pred_fallthru
        _
    $region6: #{tpu_custom_call.1} parent=1 // loop_footer
      %s18 = sadd.s32 1, %s14
    $region7: #{tpu_custom_call.1} parent=1 // loop_footer_branch
      %13 = sbr.rel target = $region3
    $region8: #{tpu_custom_call.1} parent=1 // loop_exit
      _
    %492 = vsyncpa [#allocation3], 1
    %s493 = scalar_lea.sflag [#allocation3], 1
    %494 = vsyncpa %s493, 1

</llo_original>
